<compile_context>
chip_gen: v7x
topology: tpu7x:2x2x1
jax: 0.10.0
libtpu: 0.0.40
codegen_flags: <defaults>
</compile_context>

<pallas_src>
import functools

import jax
import jax.numpy as jnp
from jax import lax
from jax.experimental import pallas as pl
from jax.experimental.pallas import tpu as pltpu


_SUB_ROWS = 128      # rows per inner sub-chunk (bounds live vreg pressure)
_MAX_UNROLL = 4      # partial unroll factor for the sub-chunk loop


def _round_up(a, m):
    return ((a + m - 1) // m) * m


def _dual_tensorcore_hint():
    """True iff this chip has >1 TensorCore (v7x). Safe fallback: False."""
    try:
        kind = jax.devices()[0].device_kind.lower().replace(" ", "")
        return ("v7" in kind) or ("tpu7" in kind)
    except Exception:
        return False


def _mlp_kernel(sub_rows, unroll,
                x_ref,
                w1_ref, b1_ref, w2_ref, b2_ref, w3_ref, b3_ref,
                w4_ref, b4_ref, w5_ref, b5_ref,
                o_ref):
    """Fused 5-layer MLP forward for one batch tile, in sub_rows-row chunks."""
    tile_rows = x_ref.shape[0]
    n_sub = tile_rows // sub_rows      # static; tile is a multiple of sub_rows

    # Hoisted out of the (partially unrolled) loop: JAX does not CSE
    # broadcast_in_dim, so re-reading biases per chunk re-emits the broadcast.
    b1 = b1_ref[...]
    b2 = b2_ref[...]
    b3 = b3_ref[...]
    b4 = b4_ref[...]
    b5 = b5_ref[...]

    def linear(h, w_ref, b):
        # bf16 x bf16 MXU matmul, f32 accumulation, f32 bias add.
        return jnp.dot(h.astype(jnp.bfloat16), w_ref[...],
                       preferred_element_type=jnp.float32) + b

    def body(s, carry):
        r = pl.multiple_of(s * sub_rows, sub_rows)
        h = x_ref[pl.ds(r, sub_rows), :]
        h = jnp.maximum(linear(h, w1_ref, b1), 0.0)   # fc1 + relu
        h = jnp.maximum(linear(h, w2_ref, b2), 0.0)   # fc2 + relu
        h = jnp.maximum(linear(h, w3_ref, b3), 0.0)   # fc3 + relu
        h = jnp.maximum(linear(h, w4_ref, b4), 0.0)   # fc4 + relu
        h = linear(h, w5_ref, b5)                     # fc5 (no activation)
        o_ref[pl.ds(r, sub_rows), :] = h.astype(o_ref.dtype)
        return carry

    # Short fixed-count inner loop, partially unrolled for scheduler
    # visibility without blowing up vreg live ranges.
    lax.fori_loop(0, n_sub, body, 0, unroll=unroll)


@functools.partial(jax.jit, static_argnames=("batch_tile",))
def net_forward(x, params, *, batch_tile=2048):
    """Pallas implementation of Net.forward.

    x: (B, 15) float32 (any B >= 1)
    params: (w1, b1, ..., w5, b5); w_i shape (in, out), b_i shape (1, out).
    returns: (B, 5) float32
    """
    B, in_dim = x.shape
    assert in_dim == 15
    out_dim = params[-1].shape[-1]      # 5

    # bf16 MXU operands (weights); biases stay f32 (added after f32 accum).
    kparams = tuple(
        p.astype(jnp.bfloat16) if i % 2 == 0 else p.astype(jnp.float32)
        for i, p in enumerate(params))

    dual = _dual_tensorcore_hint()

    # --- batch tile selection ------------------------------------------------
    tile_req = max(8, int(batch_tile))
    if B <= _SUB_ROWS:
        eff_tile = _round_up(B, 8)
        sub_rows = eff_tile
    else:
        sub_rows = _SUB_ROWS
        eff_tile = min(_round_up(tile_req, _SUB_ROWS), _round_up(B, _SUB_ROWS))
        if dual:
            # v7x only: keep >= 2 (preferably even) grid steps so both
            # TensorCores get work.  Re-round to a multiple of sub_rows after
            # halving (fixes the skipped-tail-rows bug from the old version).
            while pl.cdiv(B, eff_tile) < 2 and eff_tile >= 2 * _SUB_ROWS:
                eff_tile = _round_up(eff_tile // 2, _SUB_ROWS)
            g = pl.cdiv(B, eff_tile)
            if g > 1 and g % 2 == 1:
                cand = _round_up(pl.cdiv(B, g + 1), _SUB_ROWS)
                if cand >= _SUB_ROWS and pl.cdiv(B, cand) % 2 == 0:
                    eff_tile = cand

    grid_n = pl.cdiv(B, eff_tile)       # ragged last block handled by Pallas
    unroll = min(_MAX_UNROLL, eff_tile // sub_rows)

    # --- block specs -----------------------------------------------------------
    # Weights/biases: full-array blocks with constant index_maps -> VMEM
    # resident across all grid steps (no per-step weight DMA).
    def full_spec(arr):
        return pl.BlockSpec(arr.shape, lambda i, _n=arr.ndim: (0,) * _n)

    in_specs = [pl.BlockSpec((eff_tile, in_dim), lambda i: (i, 0))]
    in_specs += [full_spec(p) for p in kparams]
    out_specs = pl.BlockSpec((eff_tile, out_dim), lambda i: (i, 0))

    if dual and grid_n >= 2:
        core_par = getattr(pltpu, "CORE_PARALLEL", None)
        dim_sem = (core_par,) if core_par is not None else ("parallel",)
    else:
        dim_sem = ("parallel",)

    return pl.pallas_call(
        functools.partial(_mlp_kernel, sub_rows, unroll),
        out_shape=jax.ShapeDtypeStruct((B, out_dim), jnp.float32),
        grid_spec=pltpu.PrefetchScalarGridSpec(
            num_scalar_prefetch=0,
            grid=(grid_n,),
            in_specs=in_specs,
            out_specs=out_specs,
        ),
        compiler_params=pltpu.CompilerParams(dimension_semantics=dim_sem),
    )(x, *kparams)


def init_params(key):
    """Init matching PyTorch nn.Linear default U[-1/sqrt(fan_in), 1/sqrt(fan_in)].

    Weights stored as (in_features, out_features); biases as (1, out_features).
    """
    layer_dims = [(15, 50), (50, 50), (50, 50), (50, 10), (10, 5)]
    params = []
    for (fan_in, fan_out) in layer_dims:
        key, kw, kb = jax.random.split(key, 3)
        bound = 1.0 / float(fan_in) ** 0.5
        w = jax.random.uniform(kw, (fan_in, fan_out), jnp.float32,
                               minval=-bound, maxval=bound)
        b = jax.random.uniform(kb, (1, fan_out), jnp.float32,
                               minval=-bound, maxval=bound)
        params.extend([w, b])
    return tuple(params)


def _reference_forward(x, params):
    """Plain-JAX f32 reference for correctness checking."""
    w1, b1, w2, b2, w3, b3, w4, b4, w5, b5 = params
    h = jnp.maximum(x @ w1 + b1, 0.0)
    h = jnp.maximum(h @ w2 + b2, 0.0)
    h = jnp.maximum(h @ w3 + b3, 0.0)
    h = jnp.maximum(h @ w4 + b4, 0.0)
    return h @ w5 + b5


if __name__ == "__main__":
    key = jax.random.PRNGKey(0)
    key, kx_small, kx_big = jax.random.split(key, 3)
    params = init_params(key)

    # bf16 matmul inputs (f32 accumulation) -> relaxed tolerance vs f32 ref.
    TOL = dict(atol=2e-2, rtol=2e-2)

    # Small batch: single tiny tile, sub_rows == tile.
    B_small = 8
    x_small = jax.random.normal(kx_small, (B_small, 15), dtype=jnp.float32)
    out_small = jax.block_until_ready(net_forward(x_small, params))
    assert out_small.shape == (B_small, 5), out_small.shape
    assert jnp.allclose(out_small, _reference_forward(x_small, params), **TOL), \
        "small-batch mismatch vs reference"

    # Ragged batch, default tile: exercises the 128-row sub-chunk loop and the
    # masked (ragged) last block; on v7x also the 2-step CORE_PARALLEL grid.
    B_big = 300
    x_big = jax.random.normal(kx_big, (B_big, 15), dtype=jnp.float32)
    out_big = jax.block_until_ready(net_forward(x_big, params))
    assert out_big.shape == (B_big, 5), out_big.shape
    assert jnp.allclose(out_big, _reference_forward(x_big, params), **TOL), \
        "large-batch mismatch vs reference"

    # Small forced tile: multi-step grid + ragged last block on every chip.
    out_tiled = jax.block_until_ready(net_forward(x_big, params, batch_tile=256))
    assert out_tiled.shape == (B_big, 5), out_tiled.shape
    assert jnp.allclose(out_tiled, _reference_forward(x_big, params), **TOL), \
        "multi-step-grid mismatch vs reference"

    print("KERNEL_OK")
</pallas_src>

<mosaic_0001>
module attributes {stable_mosaic.version = 11 : i64} {
  func.func @_mlp_kernel(%arg0: i32, %arg1: memref<8x15xf32, #tpu.memory_space<vmem>>, %arg2: memref<15x50xbf16, #tpu.memory_space<vmem>>, %arg3: memref<1x50xf32, #tpu.memory_space<vmem>>, %arg4: memref<50x50xbf16, #tpu.memory_space<vmem>>, %arg5: memref<1x50xf32, #tpu.memory_space<vmem>>, %arg6: memref<50x50xbf16, #tpu.memory_space<vmem>>, %arg7: memref<1x50xf32, #tpu.memory_space<vmem>>, %arg8: memref<50x10xbf16, #tpu.memory_space<vmem>>, %arg9: memref<1x10xf32, #tpu.memory_space<vmem>>, %arg10: memref<10x5xbf16, #tpu.memory_space<vmem>>, %arg11: memref<1x5xf32, #tpu.memory_space<vmem>>, %arg12: memref<8x5xf32, #tpu.memory_space<vmem>>) attributes {dimension_semantics = [#tpu.dimension_semantics<parallel>], iteration_bounds = array<i64: 1>, scalar_prefetch = 0 : i64, scratch_operands = 0 : i64, tpu.core_type = #tpu.core_type<tc>, window_params = [{transform_indices = @transform_0, window_bounds = array<i64: 8, 15>}, {pipeline_mode = #tpu.pipeline_mode<synchronous>, transform_indices = @transform_1, window_bounds = array<i64: 15, 50>}, {pipeline_mode = #tpu.pipeline_mode<synchronous>, transform_indices = @transform_2, window_bounds = array<i64: 1, 50>}, {pipeline_mode = #tpu.pipeline_mode<synchronous>, transform_indices = @transform_3, window_bounds = array<i64: 50, 50>}, {pipeline_mode = #tpu.pipeline_mode<synchronous>, transform_indices = @transform_4, window_bounds = array<i64: 1, 50>}, {pipeline_mode = #tpu.pipeline_mode<synchronous>, transform_indices = @transform_5, window_bounds = array<i64: 50, 50>}, {pipeline_mode = #tpu.pipeline_mode<synchronous>, transform_indices = @transform_6, window_bounds = array<i64: 1, 50>}, {pipeline_mode = #tpu.pipeline_mode<synchronous>, transform_indices = @transform_7, window_bounds = array<i64: 50, 10>}, {pipeline_mode = #tpu.pipeline_mode<synchronous>, transform_indices = @transform_8, window_bounds = array<i64: 1, 10>}, {pipeline_mode = #tpu.pipeline_mode<synchronous>, transform_indices = @transform_9, window_bounds = array<i64: 10, 5>}, {pipeline_mode = #tpu.pipeline_mode<synchronous>, transform_indices = @transform_10, window_bounds = array<i64: 1, 5>}, {transform_indices = @transform_11, window_bounds = array<i64: 8, 5>}]} {
    %c0 = arith.constant 0 : index
    %c0_0 = arith.constant 0 : index
    %0 = vector.load %arg3[%c0, %c0_0] : memref<1x50xf32, #tpu.memory_space<vmem>>, vector<1x50xf32>
    %c0_1 = arith.constant 0 : index
    %c0_2 = arith.constant 0 : index
    %1 = vector.load %arg5[%c0_1, %c0_2] : memref<1x50xf32, #tpu.memory_space<vmem>>, vector<1x50xf32>
    %c0_3 = arith.constant 0 : index
    %c0_4 = arith.constant 0 : index
    %2 = vector.load %arg7[%c0_3, %c0_4] : memref<1x50xf32, #tpu.memory_space<vmem>>, vector<1x50xf32>
    %c0_5 = arith.constant 0 : index
    %c0_6 = arith.constant 0 : index
    %3 = vector.load %arg9[%c0_5, %c0_6] : memref<1x10xf32, #tpu.memory_space<vmem>>, vector<1x10xf32>
    %c0_7 = arith.constant 0 : index
    %c0_8 = arith.constant 0 : index
    %4 = vector.load %arg11[%c0_7, %c0_8] : memref<1x5xf32, #tpu.memory_space<vmem>>, vector<1x5xf32>
    %c0_i32 = arith.constant 0 : i32
    %c8_i32 = arith.constant 8 : i32
    %5 = arith.muli %c0_i32, %c8_i32 : i32
    %6 = tpu.assume_multiple %5, 8 : i32
    %7 = arith.index_cast %6 : i32 to index
    %c0_9 = arith.constant 0 : index
    %8 = vector.load %arg1[%7, %c0_9] : memref<8x15xf32, #tpu.memory_space<vmem>>, vector<8x15xf32>
    %9 = arith.truncf %8 : vector<8x15xf32> to vector<8x15xbf16>
    %c0_10 = arith.constant 0 : index
    %c0_11 = arith.constant 0 : index
    %10 = vector.load %arg2[%c0_10, %c0_11] : memref<15x50xbf16, #tpu.memory_space<vmem>>, vector<15x50xbf16>
    %cst = arith.constant dense<0.000000e+00> : vector<8x50xf32>
    %11 = tpu.matmul %9, %10, %cst {dimension_numbers = #tpu.dot_dimension_numbers<[1], [0], [0], [1], [0, 0, 1, 1], [], []>} : vector<8x15xbf16>, vector<15x50xbf16>, vector<8x50xf32> -> vector<8x50xf32>
    %12 = vector.broadcast %0 : vector<1x50xf32> to vector<8x50xf32>
    %13 = arith.addf %11, %12 : vector<8x50xf32>
    %cst_12 = arith.constant 0.000000e+00 : f32
    %14 = vector.broadcast %cst_12 : f32 to vector<8x50xf32>
    %15 = arith.maximumf %13, %14 : vector<8x50xf32>
    %16 = arith.truncf %15 : vector<8x50xf32> to vector<8x50xbf16>
    %c0_13 = arith.constant 0 : index
    %c0_14 = arith.constant 0 : index
    %17 = vector.load %arg4[%c0_13, %c0_14] : memref<50x50xbf16, #tpu.memory_space<vmem>>, vector<50x50xbf16>
    %cst_15 = arith.constant dense<0.000000e+00> : vector<8x50xf32>
    %18 = tpu.matmul %16, %17, %cst_15 {dimension_numbers = #tpu.dot_dimension_numbers<[1], [0], [0], [1], [0, 0, 1, 1], [], []>} : vector<8x50xbf16>, vector<50x50xbf16>, vector<8x50xf32> -> vector<8x50xf32>
    %19 = vector.broadcast %1 : vector<1x50xf32> to vector<8x50xf32>
    %20 = arith.addf %18, %19 : vector<8x50xf32>
    %cst_16 = arith.constant 0.000000e+00 : f32
    %21 = vector.broadcast %cst_16 : f32 to vector<8x50xf32>
    %22 = arith.maximumf %20, %21 : vector<8x50xf32>
    %23 = arith.truncf %22 : vector<8x50xf32> to vector<8x50xbf16>
    %c0_17 = arith.constant 0 : index
    %c0_18 = arith.constant 0 : index
    %24 = vector.load %arg6[%c0_17, %c0_18] : memref<50x50xbf16, #tpu.memory_space<vmem>>, vector<50x50xbf16>
    %cst_19 = arith.constant dense<0.000000e+00> : vector<8x50xf32>
    %25 = tpu.matmul %23, %24, %cst_19 {dimension_numbers = #tpu.dot_dimension_numbers<[1], [0], [0], [1], [0, 0, 1, 1], [], []>} : vector<8x50xbf16>, vector<50x50xbf16>, vector<8x50xf32> -> vector<8x50xf32>
    %26 = vector.broadcast %2 : vector<1x50xf32> to vector<8x50xf32>
    %27 = arith.addf %25, %26 : vector<8x50xf32>
    %cst_20 = arith.constant 0.000000e+00 : f32
    %28 = vector.broadcast %cst_20 : f32 to vector<8x50xf32>
    %29 = arith.maximumf %27, %28 : vector<8x50xf32>
    %30 = arith.truncf %29 : vector<8x50xf32> to vector<8x50xbf16>
    %c0_21 = arith.constant 0 : index
    %c0_22 = arith.constant 0 : index
    %31 = vector.load %arg8[%c0_21, %c0_22] : memref<50x10xbf16, #tpu.memory_space<vmem>>, vector<50x10xbf16>
    %cst_23 = arith.constant dense<0.000000e+00> : vector<8x10xf32>
    %32 = tpu.matmul %30, %31, %cst_23 {dimension_numbers = #tpu.dot_dimension_numbers<[1], [0], [0], [1], [0, 0, 1, 1], [], []>} : vector<8x50xbf16>, vector<50x10xbf16>, vector<8x10xf32> -> vector<8x10xf32>
    %33 = vector.broadcast %3 : vector<1x10xf32> to vector<8x10xf32>
    %34 = arith.addf %32, %33 : vector<8x10xf32>
    %cst_24 = arith.constant 0.000000e+00 : f32
    %35 = vector.broadcast %cst_24 : f32 to vector<8x10xf32>
    %36 = arith.maximumf %34, %35 : vector<8x10xf32>
    %37 = arith.truncf %36 : vector<8x10xf32> to vector<8x10xbf16>
    %c0_25 = arith.constant 0 : index
    %c0_26 = arith.constant 0 : index
    %38 = vector.load %arg10[%c0_25, %c0_26] : memref<10x5xbf16, #tpu.memory_space<vmem>>, vector<10x5xbf16>
    %cst_27 = arith.constant dense<0.000000e+00> : vector<8x5xf32>
    %39 = tpu.matmul %37, %38, %cst_27 {dimension_numbers = #tpu.dot_dimension_numbers<[1], [0], [0], [1], [0, 0, 1, 1], [], []>} : vector<8x10xbf16>, vector<10x5xbf16>, vector<8x5xf32> -> vector<8x5xf32>
    %40 = vector.broadcast %4 : vector<1x5xf32> to vector<8x5xf32>
    %41 = arith.addf %39, %40 : vector<8x5xf32>
    %42 = arith.index_cast %6 : i32 to index
    %c0_28 = arith.constant 0 : index
    %43 = vector.load %arg12[%42, %c0_28] : memref<8x5xf32, #tpu.memory_space<vmem>>, vector<8x5xf32>
    tpu.vector_store %arg12[%42, %c0_28], %41 {strides = array<i32>} : memref<8x5xf32, #tpu.memory_space<vmem>>, vector<8x5xf32>,
    %c1_i32 = arith.constant 1 : i32
    return
  }
  func.func @transform_0(%arg0: i32) -> (i32, i32) {
    %c0_i32 = arith.constant 0 : i32
    %c0_i32_0 = arith.constant 0 : i32
    return %arg0, %c0_i32 : i32, i32
  }
  func.func @transform_1(%arg0: i32) -> (i32, i32) {
    %c0_i32 = arith.constant 0 : i32
    %c0_i32_0 = arith.constant 0 : i32
    %c0_i32_1 = arith.constant 0 : i32
    return %c0_i32, %c0_i32_0 : i32, i32
  }
  func.func @transform_2(%arg0: i32) -> (i32, i32) {
    %c0_i32 = arith.constant 0 : i32
    %c0_i32_0 = arith.constant 0 : i32
    %c0_i32_1 = arith.constant 0 : i32
    return %c0_i32, %c0_i32_0 : i32, i32
  }
  func.func @transform_3(%arg0: i32) -> (i32, i32) {
    %c0_i32 = arith.constant 0 : i32
    %c0_i32_0 = arith.constant 0 : i32
    %c0_i32_1 = arith.constant 0 : i32
    return %c0_i32, %c0_i32_0 : i32, i32
  }
  func.func @transform_4(%arg0: i32) -> (i32, i32) {
    %c0_i32 = arith.constant 0 : i32
    %c0_i32_0 = arith.constant 0 : i32
    %c0_i32_1 = arith.constant 0 : i32
    return %c0_i32, %c0_i32_0 : i32, i32
  }
  func.func @transform_5(%arg0: i32) -> (i32, i32) {
    %c0_i32 = arith.constant 0 : i32
    %c0_i32_0 = arith.constant 0 : i32
    %c0_i32_1 = arith.constant 0 : i32
    return %c0_i32, %c0_i32_0 : i32, i32
  }
  func.func @transform_6(%arg0: i32) -> (i32, i32) {
    %c0_i32 = arith.constant 0 : i32
    %c0_i32_0 = arith.constant 0 : i32
    %c0_i32_1 = arith.constant 0 : i32
    return %c0_i32, %c0_i32_0 : i32, i32
  }
  func.func @transform_7(%arg0: i32) -> (i32, i32) {
    %c0_i32 = arith.constant 0 : i32
    %c0_i32_0 = arith.constant 0 : i32
    %c0_i32_1 = arith.constant 0 : i32
    return %c0_i32, %c0_i32_0 : i32, i32
  }
  func.func @transform_8(%arg0: i32) -> (i32, i32) {
    %c0_i32 = arith.constant 0 : i32
    %c0_i32_0 = arith.constant 0 : i32
    %c0_i32_1 = arith.constant 0 : i32
    return %c0_i32, %c0_i32_0 : i32, i32
  }
  func.func @transform_9(%arg0: i32) -> (i32, i32) {
    %c0_i32 = arith.constant 0 : i32
    %c0_i32_0 = arith.constant 0 : i32
    %c0_i32_1 = arith.constant 0 : i32
    return %c0_i32, %c0_i32_0 : i32, i32
  }
  func.func @transform_10(%arg0: i32) -> (i32, i32) {
    %c0_i32 = arith.constant 0 : i32
    %c0_i32_0 = arith.constant 0 : i32
    %c0_i32_1 = arith.constant 0 : i32
    return %c0_i32, %c0_i32_0 : i32, i32
  }
  func.func @transform_11(%arg0: i32) -> (i32, i32) {
    %c0_i32 = arith.constant 0 : i32
    %c0_i32_0 = arith.constant 0 : i32
    return %arg0, %c0_i32 : i32, i32
  }
}

</mosaic_0001>

<llo_original>
// kernel: net_forward.1
$region0: #{net_forward.1}
  #allocation0 [shape = 'u32[]', space=smem, size = 0x4, offset = 0x4, fixed_abs, tag = 'smem constant byte address 0x4 - core index']
  #allocation1 [shape = 'u32[144,128]{1,0:T(1,128)}', space=vmem, size = 0x12000, scoped, tag = 'internal scratch']
  %s0 = inlined_call_operand.vmem [shape: f32[8,15], index: 0, kind: input, shape index: {}]
  %s1 = inlined_call_operand.vmem [shape: bf16[15,50], index: 1, kind: input, shape index: {}]
  %s2 = inlined_call_operand.vmem [shape: f32[1,50], index: 2, kind: input, shape index: {}]
  %s3 = inlined_call_operand.vmem [shape: bf16[50,50], index: 3, kind: input, shape index: {}]
  %s4 = inlined_call_operand.vmem [shape: f32[1,50], index: 4, kind: input, shape index: {}]
  %s5 = inlined_call_operand.vmem [shape: bf16[50,50], index: 5, kind: input, shape index: {}]
  %s6 = inlined_call_operand.vmem [shape: f32[1,50], index: 6, kind: input, shape index: {}]
  %s7 = inlined_call_operand.vmem [shape: bf16[50,10], index: 7, kind: input, shape index: {}]
  %s8 = inlined_call_operand.vmem [shape: f32[1,10], index: 8, kind: input, shape index: {}]
  %s9 = inlined_call_operand.vmem [shape: bf16[10,5], index: 9, kind: input, shape index: {}]
  %s10 = inlined_call_operand.vmem [shape: f32[1,5], index: 10, kind: input, shape index: {}]
  %s11 = inlined_call_operand.hbm [shape: f32[8,5], index: 11, kind: output, shape index: {}]
  %s12 = sld [smem:[#allocation0]]
  $region54: #{net_forward.1} parent=0
    _
  %s14 = ssub.s32 1, %s12
  %s15 = scalar_select 0, %s14, %s12
  $region1: #{net_forward.1} parent=0
    #allocation2 [shape = 'u8[4096]{0}', space=vmem, size = 0x1000, scoped, tag = 'output window, operand 0, single buffered']
    #allocation3 [shape = 's32[1]{0}', space=sflag, size = 0x4, scoped, tag = 'scoped memory for net_forward.1']
    %16 = vsyncpa [#allocation3], 0
    // Predicated region
    $region2: #{net_forward.1} parent=1 // pred_check
      _
    $region3: #{net_forward.1} parent=1 // pred_check_branch
      %18 = sbr.rel (0) target = $region5
    $region4: #{net_forward.1} parent=1 // pred_region
      _
    $region5: #{net_forward.1} parent=1 // pred_fallthru
      _
    // Predicated region
    $region6: #{net_forward.1} parent=1 // pred_check
      _
    $region7: #{net_forward.1} parent=1 // pred_check_branch
      %20 = sbr.rel (0) target = $region9
    $region8: #{net_forward.1} parent=1 // pred_region
      _
    $region9: #{net_forward.1} parent=1 // pred_fallthru
      _
    // Predicated region
    $region10: #{net_forward.1} parent=1 // pred_check
      _
    $region11: #{net_forward.1} parent=1 // pred_check_branch
      %22 = sbr.rel (0) target = $region13
    $region12: #{net_forward.1} parent=1 // pred_region
      _
    $region13: #{net_forward.1} parent=1 // pred_fallthru
      _
    // Predicated region
    $region14: #{net_forward.1} parent=1 // pred_check
      _
    $region15: #{net_forward.1} parent=1 // pred_check_branch
      %24 = sbr.rel (0) target = $region17
    $region16: #{net_forward.1} parent=1 // pred_region
      _
    $region17: #{net_forward.1} parent=1 // pred_fallthru
      _
    // Predicated region
    $region18: #{net_forward.1} parent=1 // pred_check
      _
    $region19: #{net_forward.1} parent=1 // pred_check_branch
      %26 = sbr.rel (0) target = $region21
    $region20: #{net_forward.1} parent=1 // pred_region
      _
    $region21: #{net_forward.1} parent=1 // pred_fallthru
      _
    // Predicated region
    $region22: #{net_forward.1} parent=1 // pred_check
      _
    $region23: #{net_forward.1} parent=1 // pred_check_branch
      %28 = sbr.rel (0) target = $region25
    $region24: #{net_forward.1} parent=1 // pred_region
      _
    $region25: #{net_forward.1} parent=1 // pred_fallthru
      _
    // Predicated region
    $region26: #{net_forward.1} parent=1 // pred_check
      _
    $region27: #{net_forward.1} parent=1 // pred_check_branch
      %30 = sbr.rel (0) target = $region29
    $region28: #{net_forward.1} parent=1 // pred_region
      _
    $region29: #{net_forward.1} parent=1 // pred_fallthru
      _
    // Predicated region
    $region30: #{net_forward.1} parent=1 // pred_check
      _
    $region31: #{net_forward.1} parent=1 // pred_check_branch
      %32 = sbr.rel (0) target = $region33
    $region32: #{net_forward.1} parent=1 // pred_region
      _
    $region33: #{net_forward.1} parent=1 // pred_fallthru
      _
    // Predicated region
    $region34: #{net_forward.1} parent=1 // pred_check
      _
    $region35: #{net_forward.1} parent=1 // pred_check_branch
      %34 = sbr.rel (0) target = $region37
    $region36: #{net_forward.1} parent=1 // pred_region
      _
    $region37: #{net_forward.1} parent=1 // pred_fallthru
      _
    // Predicated region
    $region38: #{net_forward.1} parent=1 // pred_check
      _
    $region39: #{net_forward.1} parent=1 // pred_check_branch
      %36 = sbr.rel (0) target = $region41
    $region40: #{net_forward.1} parent=1 // pred_region
      _
    $region41: #{net_forward.1} parent=1 // pred_fallthru
      _
    // Predicated region
    $region42: #{net_forward.1} parent=1 // pred_check
      _
    $region43: #{net_forward.1} parent=1 // pred_check_branch
      %38 = sbr.rel (0) target = $region45
    $region44: #{net_forward.1} parent=1 // pred_region
      _
    $region45: #{net_forward.1} parent=1 // pred_fallthru
      _
    %v40 = vld [vmem:[%s2] sm:$0x1]
    %v41 = vld [vmem:[%s4] sm:$0x1]
    %v42 = vld [vmem:[%s6] sm:$0x1]
    %v43 = vld [vmem:[%s8] sm:$0x1]
    %v44 = vld [vmem:[%s10] sm:$0x1]
    %v45 = vld [vmem:[%s0] sm:$0xff]
    %v46 = vpack.c.bf16 %v45, %v45
    %v47 = vld [vmem:[%s1] sm:$0xf]
    %v48 = vld [vmem:[%s1 + $0x4] sm:$0xf]
    %v50 = vlaneseq
    %v51 = vshrl.u32 %v50, 7
    %v52 = vsub.s32 0, %v51
    %v53 = vrot.slane %v40, %v52
    %v57 = vunpack.c.l.b16 %v47
    %v58 = vunpack.c.l.b16 %v48
    %v59 = vpack.c.b16 %v58, %v57
    %vm60 = vcmask 121856
    %v62 = vsel %vm60, %v46, 0
    %vm64 = vcmask 1046528
    %vm65 = vcmask 1047552
    %v66 = vsel %vm64, 4294967295, 65535
    %v67 = vsel %vm65, %v66, 0
    %v69 = vand.u32 %v59, %v67
    %71 = vmatprep.subr.bf16.mxu0 0
    %72 = vmatpush1.bf16.msra.mxu0 %v69
    %73 = vmatprep.subr.bf16.mxu0 0
    %74 = vmatpush1.bf16.msra.mxu0 0
    %75 = vmatprep.subr.bf16.mxu0 0
    %76 = vmatpush1.bf16.msra.mxu0 0
    %77 = vmatprep.subr.bf16.mxu0 0
    %78 = vmatpush1.bf16.msra.mxu0 0
    %79 = vmatprep.subr.bf16.mxu0 0
    %80 = vmatpush1.bf16.msra.mxu0 0
    %81 = vmatprep.subr.bf16.mxu0 0
    %82 = vmatpush1.bf16.msra.mxu0 0
    %83 = vmatprep.subr.bf16.mxu0 0
    %84 = vmatpush1.bf16.msra.mxu0 0
    %85 = vmatprep.subr.bf16.mxu0 0
    %86 = vmatpush1.bf16.msra.mxu0 0
    %87 = vmatprep.subr.bf16.mxu0 0
    %88 = vmatpush1.bf16.msra.mxu0 0
    %89 = vmatprep.subr.bf16.mxu0 0
    %90 = vmatpush1.bf16.msra.mxu0 0
    %91 = vmatprep.subr.bf16.mxu0 0
    %92 = vmatpush1.bf16.msra.mxu0 0
    %93 = vmatprep.subr.bf16.mxu0 0
    %94 = vmatpush1.bf16.msra.mxu0 0
    %95 = vmatprep.subr.bf16.mxu0 0
    %96 = vmatpush1.bf16.msra.mxu0 0
    %97 = vmatprep.subr.bf16.mxu0 0
    %98 = vmatpush1.bf16.msra.mxu0 0
    %99 = vmatprep.subr.bf16.mxu0 0
    %100 = vmatpush1.bf16.msra.mxu0 0
    %101 = vmatprep.subr.bf16.mxu0 0
    %102 = vmatpush1.bf16.msra.mxu0 0
    %103 = vmatprep.mubr.bf16.mxu0 0
    %104 = vmatmul.mubr.bf16.gmra.mrb[0].mxu0 %v62
    %v105 = vpop.f32.mrb[0].mxu0
    %v106 = vadd.f32 %v53, %v105
    %v107 = vpop.f32.mrb[0].mxu0
    %v108 = vpop.f32.mrb[0].mxu0
    %v109 = vpop.f32.mrb[0].mxu0
    %110 = vdwg.mxu0
    %v111 = vmax.f32 %v106, 0.0
    %v112 = vpack.c.bf16 %v111, %v111
    %v113 = vld [vmem:[%s3] sm:$0xf]
    %v114 = vld [vmem:[%s3 + $0x4] sm:$0xf]
    %v115 = vld [vmem:[%s3 + $0x8] sm:$0xf]
    %v116 = vld [vmem:[%s3 + $0xc] sm:$0xf]
    %v117 = vld [vmem:[%s3 + $0x10] sm:$0xf]
    %v118 = vld [vmem:[%s3 + $0x14] sm:$0xf]
    %v119 = vld [vmem:[%s3 + $0x18] sm:$0x1]
    %v121 = vlaneseq
    %v122 = vshrl.u32 %v121, 7
    %v123 = vsub.s32 0, %v122
    %v124 = vrot.slane %v41, %v123
    %v133 = vunpack.c.l.b16 %v113
    %v134 = vunpack.c.l.b16 %v114
    %v135 = vunpack.c.l.b16 %v115
    %v136 = vunpack.c.l.b16 %v116
    %v137 = vunpack.c.l.b16 %v117
    %v138 = vunpack.c.l.b16 %v118
    %v139 = vunpack.c.l.b16 %v119
    %v140 = vpack.c.b16 %v134, %v133
    %v141 = vpack.c.b16 %v136, %v135
    %v142 = vpack.c.b16 %v138, %v137
    %v143 = vpack.c.b16 %v139, %v139
    %vm147 = vcmask 408576
    %v149 = vsel %vm147, %v112, 0
    %vm151 = vcmask 1040384
    %v153 = vsel %vm151, %v143, 0
    %155 = vmatprep.subr.bf16.mxu0 0
    %156 = vmatpush1.bf16.msra.mxu0 %v140
    %157 = vmatprep.subr.bf16.mxu0 0
    %158 = vmatpush1.bf16.msra.mxu0 %v141
    %159 = vmatprep.subr.bf16.mxu0 0
    %160 = vmatpush1.bf16.msra.mxu0 %v142
    %161 = vmatprep.subr.bf16.mxu0 0
    %162 = vmatpush1.bf16.msra.mxu0 %v153
    %163 = vmatprep.subr.bf16.mxu0 0
    %164 = vmatpush1.bf16.msra.mxu0 0
    %165 = vmatprep.subr.bf16.mxu0 0
    %166 = vmatpush1.bf16.msra.mxu0 0
    %167 = vmatprep.subr.bf16.mxu0 0
    %168 = vmatpush1.bf16.msra.mxu0 0
    %169 = vmatprep.subr.bf16.mxu0 0
    %170 = vmatpush1.bf16.msra.mxu0 0
    %171 = vmatprep.subr.bf16.mxu0 0
    %172 = vmatpush1.bf16.msra.mxu0 0
    %173 = vmatprep.subr.bf16.mxu0 0
    %174 = vmatpush1.bf16.msra.mxu0 0
    %175 = vmatprep.subr.bf16.mxu0 0
    %176 = vmatpush1.bf16.msra.mxu0 0
    %177 = vmatprep.subr.bf16.mxu0 0
    %178 = vmatpush1.bf16.msra.mxu0 0
    %179 = vmatprep.subr.bf16.mxu0 0
    %180 = vmatpush1.bf16.msra.mxu0 0
    %181 = vmatprep.subr.bf16.mxu0 0
    %182 = vmatpush1.bf16.msra.mxu0 0
    %183 = vmatprep.subr.bf16.mxu0 0
    %184 = vmatpush1.bf16.msra.mxu0 0
    %185 = vmatprep.subr.bf16.mxu0 0
    %186 = vmatpush1.bf16.msra.mxu0 0
    %187 = vmatprep.mubr.bf16.mxu0 0
    %188 = vmatmul.mubr.bf16.gmra.mrb[0].mxu0 %v149
    %v189 = vpop.f32.mrb[0].mxu0
    %v190 = vadd.f32 %v124, %v189
    %v191 = vpop.f32.mrb[0].mxu0
    %v192 = vpop.f32.mrb[0].mxu0
    %v193 = vpop.f32.mrb[0].mxu0
    %194 = vdwg.mxu0
    %v195 = vmax.f32 %v190, 0.0
    %v196 = vpack.c.bf16 %v195, %v195
    %v197 = vld [vmem:[%s5] sm:$0xf]
    %v198 = vld [vmem:[%s5 + $0x4] sm:$0xf]
    %v199 = vld [vmem:[%s5 + $0x8] sm:$0xf]
    %v200 = vld [vmem:[%s5 + $0xc] sm:$0xf]
    %v201 = vld [vmem:[%s5 + $0x10] sm:$0xf]
    %v202 = vld [vmem:[%s5 + $0x14] sm:$0xf]
    %v203 = vld [vmem:[%s5 + $0x18] sm:$0x1]
    %v205 = vlaneseq
    %v206 = vshrl.u32 %v205, 7
    %v207 = vsub.s32 0, %v206
    %v208 = vrot.slane %v42, %v207
    %v217 = vunpack.c.l.b16 %v197
    %v218 = vunpack.c.l.b16 %v198
    %v219 = vunpack.c.l.b16 %v199
    %v220 = vunpack.c.l.b16 %v200
    %v221 = vunpack.c.l.b16 %v201
    %v222 = vunpack.c.l.b16 %v202
    %v223 = vunpack.c.l.b16 %v203
    %v224 = vpack.c.b16 %v218, %v217
    %v225 = vpack.c.b16 %v220, %v219
    %v226 = vpack.c.b16 %v222, %v221
    %v227 = vpack.c.b16 %v223, %v223
    %v232 = vsel %vm147, %v196, 0
    %v235 = vsel %vm151, %v227, 0
    %237 = vmatprep.subr.bf16.mxu0 0
    %238 = vmatpush1.bf16.msra.mxu0 %v224
    %239 = vmatprep.subr.bf16.mxu0 0
    %240 = vmatpush1.bf16.msra.mxu0 %v225
    %241 = vmatprep.subr.bf16.mxu0 0
    %242 = vmatpush1.bf16.msra.mxu0 %v226
    %243 = vmatprep.subr.bf16.mxu0 0
    %244 = vmatpush1.bf16.msra.mxu0 %v235
    %245 = vmatprep.subr.bf16.mxu0 0
    %246 = vmatpush1.bf16.msra.mxu0 0
    %247 = vmatprep.subr.bf16.mxu0 0
    %248 = vmatpush1.bf16.msra.mxu0 0
    %249 = vmatprep.subr.bf16.mxu0 0
    %250 = vmatpush1.bf16.msra.mxu0 0
    %251 = vmatprep.subr.bf16.mxu0 0
    %252 = vmatpush1.bf16.msra.mxu0 0
    %253 = vmatprep.subr.bf16.mxu0 0
    %254 = vmatpush1.bf16.msra.mxu0 0
    %255 = vmatprep.subr.bf16.mxu0 0
    %256 = vmatpush1.bf16.msra.mxu0 0
    %257 = vmatprep.subr.bf16.mxu0 0
    %258 = vmatpush1.bf16.msra.mxu0 0
    %259 = vmatprep.subr.bf16.mxu0 0
    %260 = vmatpush1.bf16.msra.mxu0 0
    %261 = vmatprep.subr.bf16.mxu0 0
    %262 = vmatpush1.bf16.msra.mxu0 0
    %263 = vmatprep.subr.bf16.mxu0 0
    %264 = vmatpush1.bf16.msra.mxu0 0
    %265 = vmatprep.subr.bf16.mxu0 0
    %266 = vmatpush1.bf16.msra.mxu0 0
    %267 = vmatprep.subr.bf16.mxu0 0
    %268 = vmatpush1.bf16.msra.mxu0 0
    %269 = vmatprep.mubr.bf16.mxu0 0
    %270 = vmatmul.mubr.bf16.gmra.mrb[0].mxu0 %v232
    %v271 = vpop.f32.mrb[0].mxu0
    %v272 = vadd.f32 %v208, %v271
    %v273 = vpop.f32.mrb[0].mxu0
    %v274 = vpop.f32.mrb[0].mxu0
    %v275 = vpop.f32.mrb[0].mxu0
    %276 = vdwg.mxu0
    %v277 = vmax.f32 %v272, 0.0
    %v278 = vpack.c.bf16 %v277, %v277
    %v279 = vld [vmem:[%s7] sm:$0xf]
    %v280 = vld [vmem:[%s7 + $0x4] sm:$0xf]
    %v281 = vld [vmem:[%s7 + $0x8] sm:$0xf]
    %v282 = vld [vmem:[%s7 + $0xc] sm:$0xf]
    %v283 = vld [vmem:[%s7 + $0x10] sm:$0xf]
    %v284 = vld [vmem:[%s7 + $0x14] sm:$0xf]
    %v285 = vld [vmem:[%s7 + $0x18] sm:$0x1]
    %v287 = vlaneseq
    %v288 = vshrl.u32 %v287, 7
    %v289 = vsub.s32 0, %v288
    %v290 = vrot.slane %v43, %v289
    %v299 = vunpack.c.l.b16 %v279
    %v300 = vunpack.c.l.b16 %v280
    %v301 = vunpack.c.l.b16 %v281
    %v302 = vunpack.c.l.b16 %v282
    %v303 = vunpack.c.l.b16 %v283
    %v304 = vunpack.c.l.b16 %v284
    %v305 = vunpack.c.l.b16 %v285
    %v306 = vpack.c.b16 %v300, %v299
    %v307 = vpack.c.b16 %v302, %v301
    %v308 = vpack.c.b16 %v304, %v303
    %v309 = vpack.c.b16 %v305, %v305
    %v314 = vsel %vm147, %v278, 0
    %v317 = vsel %vm151, %v309, 0
    %319 = vmatprep.subr.bf16.mxu0 0
    %320 = vmatpush1.bf16.msra.mxu0 %v306
    %321 = vmatprep.subr.bf16.mxu0 0
    %322 = vmatpush1.bf16.msra.mxu0 %v307
    %323 = vmatprep.subr.bf16.mxu0 0
    %324 = vmatpush1.bf16.msra.mxu0 %v308
    %325 = vmatprep.subr.bf16.mxu0 0
    %326 = vmatpush1.bf16.msra.mxu0 %v317
    %327 = vmatprep.subr.bf16.mxu0 0
    %328 = vmatpush1.bf16.msra.mxu0 0
    %329 = vmatprep.subr.bf16.mxu0 0
    %330 = vmatpush1.bf16.msra.mxu0 0
    %331 = vmatprep.subr.bf16.mxu0 0
    %332 = vmatpush1.bf16.msra.mxu0 0
    %333 = vmatprep.subr.bf16.mxu0 0
    %334 = vmatpush1.bf16.msra.mxu0 0
    %335 = vmatprep.subr.bf16.mxu0 0
    %336 = vmatpush1.bf16.msra.mxu0 0
    %337 = vmatprep.subr.bf16.mxu0 0
    %338 = vmatpush1.bf16.msra.mxu0 0
    %339 = vmatprep.subr.bf16.mxu0 0
    %340 = vmatpush1.bf16.msra.mxu0 0
    %341 = vmatprep.subr.bf16.mxu0 0
    %342 = vmatpush1.bf16.msra.mxu0 0
    %343 = vmatprep.subr.bf16.mxu0 0
    %344 = vmatpush1.bf16.msra.mxu0 0
    %345 = vmatprep.subr.bf16.mxu0 0
    %346 = vmatpush1.bf16.msra.mxu0 0
    %347 = vmatprep.subr.bf16.mxu0 0
    %348 = vmatpush1.bf16.msra.mxu0 0
    %349 = vmatprep.subr.bf16.mxu0 0
    %350 = vmatpush1.bf16.msra.mxu0 0
    %351 = vmatprep.mubr.bf16.mxu0 0
    %352 = vmatmul.mubr.bf16.gmra.mrb[0].mxu0 %v314
    %v353 = vpop.f32.mrb[0].mxu0
    %v354 = vadd.f32 %v290, %v353
    %v355 = vpop.f32.mrb[0].mxu0
    %v356 = vpop.f32.mrb[0].mxu0
    %v357 = vpop.f32.mrb[0].mxu0
    %358 = vdwg.mxu0
    %v359 = vmax.f32 %v354, 0.0
    %v360 = vpack.c.bf16 %v359, %v359
    %v361 = vld [vmem:[%s9] sm:$0xf]
    %v362 = vld [vmem:[%s9 + $0x4] sm:$0x1]
    %v364 = vlaneseq
    %v365 = vshrl.u32 %v364, 7
    %v366 = vsub.s32 0, %v365
    %v367 = vrot.slane %v44, %v366
    %v371 = vunpack.c.l.b16 %v361
    %v372 = vunpack.c.l.b16 %v362
    %v373 = vpack.c.b16 %v372, %v371
    %vm374 = vcmask 80896
    %v376 = vsel %vm374, %v360, 0
    %vm378 = vcmask 1044480
    %v380 = vsel %vm378, %v373, 0
    %382 = vmatprep.subr.bf16.mxu0 0
    %383 = vmatpush1.bf16.msra.mxu0 %v380
    %384 = vmatprep.subr.bf16.mxu0 0
    %385 = vmatpush1.bf16.msra.mxu0 0
    %386 = vmatprep.subr.bf16.mxu0 0
    %387 = vmatpush1.bf16.msra.mxu0 0
    %388 = vmatprep.subr.bf16.mxu0 0
    %389 = vmatpush1.bf16.msra.mxu0 0
    %390 = vmatprep.subr.bf16.mxu0 0
    %391 = vmatpush1.bf16.msra.mxu0 0
    %392 = vmatprep.subr.bf16.mxu0 0
    %393 = vmatpush1.bf16.msra.mxu0 0
    %394 = vmatprep.subr.bf16.mxu0 0
    %395 = vmatpush1.bf16.msra.mxu0 0
    %396 = vmatprep.subr.bf16.mxu0 0
    %397 = vmatpush1.bf16.msra.mxu0 0
    %398 = vmatprep.subr.bf16.mxu0 0
    %399 = vmatpush1.bf16.msra.mxu0 0
    %400 = vmatprep.subr.bf16.mxu0 0
    %401 = vmatpush1.bf16.msra.mxu0 0
    %402 = vmatprep.subr.bf16.mxu0 0
    %403 = vmatpush1.bf16.msra.mxu0 0
    %404 = vmatprep.subr.bf16.mxu0 0
    %405 = vmatpush1.bf16.msra.mxu0 0
    %406 = vmatprep.subr.bf16.mxu0 0
    %407 = vmatpush1.bf16.msra.mxu0 0
    %408 = vmatprep.subr.bf16.mxu0 0
    %409 = vmatpush1.bf16.msra.mxu0 0
    %410 = vmatprep.subr.bf16.mxu0 0
    %411 = vmatpush1.bf16.msra.mxu0 0
    %412 = vmatprep.subr.bf16.mxu0 0
    %413 = vmatpush1.bf16.msra.mxu0 0
    %414 = vmatprep.mubr.bf16.mxu0 0
    %415 = vmatmul.mubr.bf16.gmra.mrb[0].mxu0 %v376
    %v416 = vpop.f32.mrb[0].mxu0
    %v417 = vadd.f32 %v367, %v416
    %v418 = vpop.f32.mrb[0].mxu0
    %v419 = vpop.f32.mrb[0].mxu0
    %v420 = vpop.f32.mrb[0].mxu0
    %421 = vdwg.mxu0
    %vm422 = vcmask 39936
    %423 = vst.msk [vmem:[#allocation2] sm:$0xff] %vm422, %v417
    // Predicated region
    $region46: #{net_forward.1} parent=1 // pred_check
      _
    $region47: #{net_forward.1} parent=1 // pred_check_branch
      %425 = sbr.rel (0) target = $region49
    $region48: #{net_forward.1} parent=1 // pred_region
      %s427 = ssub.s32 128, 128
      %428 = vsyncadd [#allocation3], %s427
      %s430 = sshll.u32 [#allocation2], 4
      %s431 = int_to_ptr.vmem [resolvable:$true] %s430
      %433 = dma.vmem_to_hbm [thread:$0]  %s431, 128, %s11, [#allocation3]
    $region49: #{net_forward.1} parent=1 // pred_fallthru
      _
    // Predicated region
    $region50: #{net_forward.1} parent=1 // pred_check
      _
    $region51: #{net_forward.1} parent=1 // pred_check_branch
      %435 = sbr.rel (0) target = $region53
    $region52: #{net_forward.1} parent=1 // pred_region
      %436 = dma.done [#allocation3], 128
    $region53: #{net_forward.1} parent=1 // pred_fallthru
      _
    %437 = vsyncpa [#allocation3], 1

</llo_original>
